<compile_context>
chip_gen: v6e
topology: v6e:2x2x1
jax: 0.10.0
libtpu: 0.0.40
codegen_flags: <defaults>
</compile_context>

<pallas_src>
import functools

import jax
import jax.numpy as jnp
from jax import lax
from jax.experimental import pallas as pl
from jax.experimental.pallas import tpu as pltpu


def _round_up(x, m):
    return ((x + m - 1) // m) * m


def _cdiv(a, b):
    return (a + b - 1) // b


def _channel_pool_kernel_single(x_ref, o_ref, *, inv_c):
    # Whole channel extent lives in this block -> reduce and write output directly
    # (no accumulator scratch, no read-modify-write).
    s = jnp.sum(x_ref[...].astype(jnp.float32), axis=1, keepdims=True)
    o_ref[...] = (s * inv_c).astype(o_ref.dtype)


def _channel_pool_kernel_multi(x_ref, o_ref, acc_ref, *, inv_c, c_total, c_chunk):
    # x_ref: (BN, C_chunk, T) ; o_ref: (BN, 1, T) ; acc_ref: (BN, 1, T) f32 resident scratch
    c_idx = pl.program_id(2)

    @pl.when(c_idx == 0)
    def _():
        acc_ref[...] = jnp.zeros_like(acc_ref)

    x = x_ref[...].astype(jnp.float32)
    # Mask the channel tail: the last chunk may read OOB rows (undefined data); any
    # global channel id >= C must contribute exactly 0 to the sum.
    ch = c_idx * c_chunk + lax.broadcasted_iota(jnp.int32, x.shape, 1)
    x = jnp.where(ch < c_total, x, 0.0)
    acc_ref[...] += jnp.sum(x, axis=1, keepdims=True)

    @pl.when(c_idx == pl.num_programs(2) - 1)
    def _():
        # compile-time 1/C multiply (no per-element divide), then cast to output dtype
        o_ref[...] = (acc_ref[...] * inv_c).astype(o_ref.dtype)


def _choose_tiles(N, C, HW, itemsize, budget_bytes):
    """Pick (BN, C_chunk, T, nN, nS, nC). No HBM padding anywhere; tails are ragged."""
    LANE = 128
    SUB = max(8, 32 // itemsize)   # dtype-aware sublane packing: 8 (f32) / 16 (bf16) / 32 (i8)
    MAX_T = 8192                   # lanes per spatial tile

    # --- spatial tiling: full-dim block when it fits (128-rule exception), else ceil-tiled
    if HW <= MAX_T:
        T = HW
        nS = 1
    else:
        nS0 = _cdiv(HW, MAX_T)
        T = _round_up(_cdiv(HW, nS0), LANE)
        nS = _cdiv(HW, T)

    # --- channel chunking: balanced chunks (no round_up(C, C_chunk) over-read); tail masked
    c_chunk_max = max(SUB, budget_bytes // (T * itemsize))
    if C <= c_chunk_max:
        C_chunk = C                # full channel extent -> (8,128) rule via full-dim exception
        nC = 1
    else:
        nC = _cdiv(C, c_chunk_max)
        C_chunk = _round_up(_cdiv(C, nC), SUB)
        nC = _cdiv(C, C_chunk)

    # --- batch folding to amortize per-grid-step overhead; ragged last batch block allowed
    bn_max = max(1, budget_bytes // max(1, C_chunk * T * itemsize))
    BN = min(N, bn_max)

    # --- megacore (v7x, 2 TCs): ensure at least 2 blocks on some "parallel" axis when possible
    if nS == 1 and N >= 2:
        BN = min(BN, _cdiv(N, 2))
    elif nS == 1 and N == 1 and HW > LANE:
        T = _round_up(_cdiv(HW, 2), LANE)
        nS = _cdiv(HW, T)

    nN = _cdiv(N, BN)
    return BN, C_chunk, T, nN, nS, nC


def channel_pool_avg(x, budget_bytes=8 * 1024 * 1024):
    """x: (N, C, H, W) -> (N, 1, H, W), mean over channels (keepdim=True)."""
    N, C, H, W = x.shape
    HW = H * W
    itemsize = jnp.dtype(x.dtype).itemsize

    BN, C_chunk, T, nN, nS, nC = _choose_tiles(N, C, HW, itemsize, budget_bytes)

    x_flat = x.reshape(N, C, HW)   # contiguous reshape: no HBM copy, no padding pass
    inv_c = float(1.0 / C)

    if nC == 1:
        kernel = functools.partial(_channel_pool_kernel_single, inv_c=inv_c)
        scratch_shapes = []
    else:
        kernel = functools.partial(
            _channel_pool_kernel_multi, inv_c=inv_c, c_total=C, c_chunk=C_chunk)
        scratch_shapes = [pltpu.VMEM((BN, 1, T), jnp.float32)]

    # Explicit scoped-VMEM limit: covers the double-buffered input blocks + output + scratch
    # with headroom, above v5e's 16 MiB default and safely under v7x's 64 MiB physical VMEM.
    in_block_bytes = BN * C_chunk * T * itemsize
    out_block_bytes = BN * T * itemsize
    acc_bytes = BN * T * 4 if nC > 1 else 0
    vmem_need = 2 * in_block_bytes + 2 * out_block_bytes + acc_bytes
    vmem_limit = int(min(max(vmem_need * 2 + (2 << 20), 16 << 20), 48 << 20))

    cost = pl.CostEstimate(
        flops=N * C * HW,
        transcendentals=0,
        bytes_accessed=N * C * HW * itemsize + N * HW * itemsize,
    )

    out_flat = pl.pallas_call(
        kernel,
        out_shape=jax.ShapeDtypeStruct((N, 1, HW), x.dtype),
        grid_spec=pltpu.PrefetchScalarGridSpec(
            num_scalar_prefetch=0,
            grid=(nN, nS, nC),  # reduction (channel-chunk) axis last
            in_specs=[pl.BlockSpec((BN, C_chunk, T), lambda n, s, c: (n, c, s))],
            out_specs=pl.BlockSpec((BN, 1, T), lambda n, s, c: (n, 0, s)),
            scratch_shapes=scratch_shapes,
        ),
        compiler_params=pltpu.CompilerParams(
            dimension_semantics=("parallel", "parallel", "arbitrary"),
            vmem_limit_bytes=vmem_limit,
        ),
        cost_estimate=cost,
    )(x_flat)

    return out_flat.reshape(N, 1, H, W)


if __name__ == "__main__":
    key = jax.random.PRNGKey(0)
    x = jax.random.normal(key, (2, 4, 16, 16), dtype=jnp.float32)

    out = channel_pool_avg(x)
    out = jax.block_until_ready(out)

    # correctness check against plain-JAX reference
    ref = jnp.mean(x, axis=1, keepdims=True)
    assert out.shape == (2, 1, 16, 16), out.shape
    assert jnp.allclose(out, ref, atol=1e-5, rtol=1e-5), "mismatch vs reference"

    print("KERNEL_OK")
</pallas_src>

<mosaic_0001>
module attributes {stable_mosaic.version = 11 : i64} {
  func.func @_channel_pool_kernel_single(%arg0: i32, %arg1: i32, %arg2: i32, %arg3: memref<1x4x256xf32, #tpu.memory_space<vmem>>, %arg4: memref<1x1x256xf32, #tpu.memory_space<vmem>>) attributes {dimension_semantics = [#tpu.dimension_semantics<parallel>, #tpu.dimension_semantics<parallel>, #tpu.dimension_semantics<arbitrary>], iteration_bounds = array<i64: 2, 1, 1>, scalar_prefetch = 0 : i64, scratch_operands = 0 : i64, tpu.core_type = #tpu.core_type<tc>, window_params = [{transform_indices = @transform_0, window_bounds = array<i64: 1, 4, 256>}, {transform_indices = @transform_1, window_bounds = array<i64: 1, 1, 256>}]} {
    %c0 = arith.constant 0 : index
    %c0_0 = arith.constant 0 : index
    %c0_1 = arith.constant 0 : index
    %0 = vector.load %arg3[%c0, %c0_0, %c0_1] : memref<1x4x256xf32, #tpu.memory_space<vmem>>, vector<1x4x256xf32>
    %cst = arith.constant dense<0.000000e+00> : vector<1x256xf32>
    %1 = vector.multi_reduction <add>, %0, %cst [1] : vector<1x4x256xf32> to vector<1x256xf32>
    %2 = vector.shape_cast %1 : vector<1x256xf32> to vector<1x1x256xf32>
    %cst_2 = arith.constant 2.500000e-01 : f32
    %3 = vector.broadcast %cst_2 : f32 to vector<1x1x256xf32>
    %4 = arith.mulf %2, %3 : vector<1x1x256xf32>
    %c0_3 = arith.constant 0 : index
    %c0_4 = arith.constant 0 : index
    %c0_5 = arith.constant 0 : index
    %5 = vector.load %arg4[%c0_3, %c0_4, %c0_5] : memref<1x1x256xf32, #tpu.memory_space<vmem>>, vector<1x1x256xf32>
    tpu.vector_store %arg4[%c0_3, %c0_4, %c0_5], %4 {strides = array<i32>} : memref<1x1x256xf32, #tpu.memory_space<vmem>>, vector<1x1x256xf32>,
    return
  }
  func.func @transform_0(%arg0: i32, %arg1: i32, %arg2: i32) -> (i32, i32, i32) {
    %c0_i32 = arith.constant 0 : i32
    return %arg0, %arg2, %arg1 : i32, i32, i32
  }
  func.func @transform_1(%arg0: i32, %arg1: i32, %arg2: i32) -> (i32, i32, i32) {
    %c0_i32 = arith.constant 0 : i32
    %c0_i32_0 = arith.constant 0 : i32
    return %arg0, %c0_i32, %arg1 : i32, i32, i32
  }
}

</mosaic_0001>

<llo_original>
// kernel: tpu_custom_call.1
$region0: #{tpu_custom_call.1}
  #allocation0 [shape = 'u32[]', space=smem, size = 0x4, offset = 0x4, fixed_abs, tag = 'smem constant byte address 0x4 - core index']
  #allocation1 [shape = 'u32[144,128]{1,0:T(1,128)}', space=vmem, size = 0x12000, scoped, tag = 'internal scratch']
  %s0 = inlined_call_operand.hbm [shape: f32[2,4,256], index: 0, kind: input, shape index: {}]
  %s1 = inlined_call_operand.hbm [shape: f32[2,1,256], index: 1, kind: output, shape index: {}]
  %s2 = sld [smem:[#allocation0]]
  $region41: #{tpu_custom_call.1} parent=0
    _
  %s4 = ssub.s32 1, %s2
  %s5 = scalar_select 0, %s4, %s2
  $region1: #{tpu_custom_call.1} parent=0
    #allocation2 [shape = 'u8[8192]{0}', space=vmem, size = 0x2000, scoped, tag = 'input window, operand 0']
    #allocation3 [shape = 's32[2]{0}', space=sflag, size = 0x8, scoped, tag = 'scoped memory for tpu_custom_call.1']
    #allocation4 [shape = 's32[2]{0}', space=sflag, size = 0x8, scoped, tag = 'scoped memory for tpu_custom_call.1']
    #allocation5 [shape = 'u8[2048]{0}', space=vmem, size = 0x800, scoped, tag = 'output window, operand 0']
    %6 = vsyncpa [#allocation3], 0
    %s7 = scalar_lea.sflag [#allocation3], 1
    %8 = vsyncpa %s7, 0
    %9 = vsyncpa [#allocation4], 0
    %s10 = scalar_lea.sflag [#allocation4], 1
    %11 = vsyncpa %s10, 0
    loop: start=0, step=1, limit=4
    $region2: #{tpu_custom_call.1} parent=1 // loop_pre_header
      _
    $region3: #{tpu_custom_call.1} parent=1 // loop_header
      %s13 = sphi 0, %s17
      %p14 = scmp.ge.s32.totalorder %s13, 4
      %s20 = sphi 0, %s39
      %s21 = sphi 0, %s35
      %s22 = sphi 0, %s31
      %s23 = sphi 0, %s20
      %s24 = sphi 0, %s21
      %s25 = sphi 0, %s22
      %s26 = sphi 0, %s23
      %s27 = sphi 0, %s24
      %s28 = sphi 0, %s25
      %s46 = sphi 0, %s48
      %s49 = sphi 0, %s46
      %s50 = sphi 0, %s49
      %s66 = sphi 0, %s50
      %s74 = sphi 0, %s76
      %s77 = sphi 0, %s74
      %s78 = sphi 0, %s77
      %s94 = sphi 0, %s78
    $region4: #{tpu_custom_call.1} parent=1 // loop_header_branch
      %16 = sbr.rel (%p14) target = $region8
    $region5: #{tpu_custom_call.1} parent=1 // loop_body
      %s18 = ssub.s32 %s13, 1
      %s19 = ssub.s32 %s13, 2
      %s29 = sadd.s32 1, %s22
      %p30 = scmp.ge.s32.totalorder %s29, 1
      %s31 = scalar_select %p30, 0, %s29
      %s32 = sadd.s32 1, %s21
      %s33 = scalar_select %p30, %s32, %s21
      %p34 = scmp.ge.s32.totalorder %s33, 1
      %s35 = scalar_select %p34, 0, %s33
      %s36 = sadd.s32 1, %s20
      %s37 = scalar_select %p34, %s36, %s20
      %p38 = scmp.ge.s32.totalorder %s37, 2
      %s39 = scalar_select %p38, 0, %s37
      %s40 = ssub.s32 %s20, %s39
      %s41 = ssub.s32 %s22, %s31
      %s42 = sor.u32 %s40, %s41
      %s43 = ssub.s32 %s21, %s35
      %s44 = sor.u32 %s42, %s43
      %p45 = scmp.eq.s32.totalorder %s44, 0
      %s47 = sadd.s32 %s46, 1
      %s48 = scalar_select %p45, %s46, %s47
      %p51 = pneg %p45
      %p52 = scmp.eq.s32.totalorder %s13, 1
      %p53 = por %p51, %p52
      %p54 = scmp.ne.s32.totalorder %s46, %s49
      %p55 = scmp.eq.s32.totalorder %s13, 0
      %p56 = por %p54, %p55
      %p57 = scmp.ne.s32.totalorder %s46, %s49
      %p58 = scmp.eq.s32.totalorder %s18, 1
      %p59 = por %p57, %p58
      %p60 = scmp.ne.s32.totalorder %s49, %s50
      %p61 = scmp.eq.s32.totalorder %s18, 0
      %p62 = por %p60, %p61
      %p63 = scmp.ne.s32.totalorder %s49, %s50
      %p64 = scmp.eq.s32.totalorder %s19, 1
      %p65 = por %p63, %p64
      %p67 = scmp.ne.s32.totalorder %s50, %s66
      %p68 = scmp.eq.s32.totalorder %s19, 0
      %p69 = por %p67, %p68
      %s70 = ssub.s32 %s20, %s39
      %s71 = ssub.s32 %s21, %s35
      %s72 = sor.u32 %s70, %s71
      %p73 = scmp.eq.s32.totalorder %s72, 0
      %s75 = sadd.s32 %s74, 1
      %s76 = scalar_select %p73, %s74, %s75
      %p79 = pneg %p73
      %p80 = scmp.eq.s32.totalorder %s13, 1
      %p81 = por %p79, %p80
      %p82 = scmp.ne.s32.totalorder %s74, %s77
      %p83 = scmp.eq.s32.totalorder %s13, 0
      %p84 = por %p82, %p83
      %p85 = scmp.ne.s32.totalorder %s74, %s77
      %p86 = scmp.eq.s32.totalorder %s18, 1
      %p87 = por %p85, %p86
      %p88 = scmp.ne.s32.totalorder %s77, %s78
      %p89 = scmp.eq.s32.totalorder %s18, 0
      %p90 = por %p88, %p89
      %p91 = scmp.ne.s32.totalorder %s77, %s78
      %p92 = scmp.eq.s32.totalorder %s19, 1
      %p93 = por %p91, %p92
      %p95 = scmp.ne.s32.totalorder %s78, %s94
      %p96 = scmp.eq.s32.totalorder %s19, 0
      %p97 = por %p95, %p96
      %p98 = scmp.le.s32.totalorder 1, %s13
      %p99 = scmp.lt.s32.totalorder %s13, 3
      %p100 = pnand %p98, %p99
      %p101 = pneg %p100
      // Predicated region
      $region9: #{tpu_custom_call.1} parent=5 // pred_check
        _
      $region10: #{tpu_custom_call.1} parent=5 // pred_check_branch
        %103 = sbr.rel (%p100) target = $region12
      $region11: #{tpu_custom_call.1} parent=5 // pred_region
        %s104 = ssub.s32 %s13, 1
      $region12: #{tpu_custom_call.1} parent=5 // pred_fallthru
        _
      %p105 = scmp.lt.s32.totalorder %s13, 2
      // Predicated region
      $region13: #{tpu_custom_call.1} parent=5 // pred_check
        %p106 = pneg %p105
      $region14: #{tpu_custom_call.1} parent=5 // pred_check_branch
        %108 = sbr.rel (%p106) target = $region16
      $region15: #{tpu_custom_call.1} parent=5 // pred_region
        // Predicated region
        $region17: #{tpu_custom_call.1} parent=15 // pred_check
          %p109 = pneg %p56
        $region18: #{tpu_custom_call.1} parent=15 // pred_check_branch
          %111 = sbr.rel (%p109) target = $region20
        $region19: #{tpu_custom_call.1} parent=15 // pred_region
          %s112 = sand.u32 %s46, 1
          %s113 = scalar_lea.sflag [#allocation3], %s112
          %s114 = sand.u32 %s46, 1
          %s115 = smul.addr %s114, 8
          %s116 = scalar_lea.vmem [#allocation2], %s115
          %s117 = smul.u32 2, %s21
          %s119 = ssub.s32 128, 128
          %120 = vsyncadd %s113, %s119
          %s121 = smul.addr %s22, 2
          %s122 = sadd.s32 %s117, %s121
          %s123 = smul.addr %s20, 2
          %s124 = sadd.s32 %s122, %s123
          %s125 = smul.addr %s124, 64
          %s126 = scalar_lea.hbm %s0, %s125
          %s128 = sshll.u32 %s116, 4
          %s129 = int_to_ptr.vmem [resolvable:$true] %s128
          %131 = dma.hbm_to_vmem [thread:$0]  %s126, 128, %s129, %s113
        $region20: #{tpu_custom_call.1} parent=15 // pred_fallthru
          _
      $region16: #{tpu_custom_call.1} parent=5 // pred_fallthru
        _
      %p132 = scmp.le.s32.totalorder 1, %s13
      %p133 = scmp.lt.s32.totalorder %s13, 3
      %p134 = pnand %p132, %p133
      %p135 = pneg %p134
      // Predicated region
      $region21: #{tpu_custom_call.1} parent=5 // pred_check
        _
      $region22: #{tpu_custom_call.1} parent=5 // pred_check_branch
        %137 = sbr.rel (%p134) target = $region24
      $region23: #{tpu_custom_call.1} parent=5 // pred_region
        %s138 = ssub.s32 %s13, 1
        %s139 = sand.u32 %s49, 1
        %s140 = scalar_lea.sflag [#allocation3], %s139
        %s141 = sand.u32 %s49, 1
        %s142 = smul.addr %s141, 8
        %s143 = scalar_lea.vmem [#allocation2], %s142
        // Predicated region
        $region25: #{tpu_custom_call.1} parent=23 // pred_check
          %p144 = pneg %p62
        $region26: #{tpu_custom_call.1} parent=23 // pred_check_branch
          %146 = sbr.rel (%p144) target = $region28
        $region27: #{tpu_custom_call.1} parent=23 // pred_region
          %147 = dma.done %s140, 128
        $region28: #{tpu_custom_call.1} parent=23 // pred_fallthru
          _
        %s148 = sand.u32 %s49, 1
        %s149 = scalar_lea.sflag [#allocation3], %s148
        %s150 = sand.u32 %s49, 1
        %s151 = smul.addr %s150, 8
        %s152 = scalar_lea.vmem [#allocation2], %s151
        %p153 = pneg %p62
        %p154 = pneg %p59
        %p155 = pneg %p90
        %p156 = pneg %p87
        %s157 = sand.u32 %s77, 1
        %s158 = scalar_lea.sflag [#allocation4], %s157
        %s159 = sand.u32 %s77, 1
        %s160 = smul.addr %s159, 2
        %s161 = scalar_lea.vmem [#allocation5], %s160
        %s162 = smul.u32 2, %s24
        %s163 = smul.u32 2, %s24
        %v164 = vld [vmem:[%s143] sm:$0xff]
        %v166 = vcombine.high %v164, %v164
        %vm168 = vcmask 1043456
        %v169 = vsel %vm168, %v164, 0.0
        %v170 = vrot.slane %v169, 4
        %v171 = vadd.f32 %v169, %v170
        %v172 = vrot.slane %v171, 2
        %v173 = vadd.f32 %v171, %v172
        %v174 = vrot.slane %v173, 1
        %v175 = vadd.f32 %v173, %v174
        %v176 = vsel %vm168, %v166, 0.0
        %v177 = vrot.slane %v176, 4
        %v178 = vadd.f32 %v176, %v177
        %v179 = vrot.slane %v178, 2
        %v180 = vadd.f32 %v178, %v179
        %v181 = vrot.slane %v180, 1
        %v182 = vadd.f32 %v180, %v181
        %v183 = vmul.f32 %v175, 0.25
        %v184 = vmul.f32 %v182, 0.25
        %v187 = vcombine.low %v183, %v184
        %v189 = vunpack.c.l.s4 1966171168
        %v190 = vunpack.c.0.s8 %v189
        %v191 = vlaneseq
        %v192 = vshrl.u32 %v191, 7
        %v193 = vsub.s32 %v190, %v192
        %v194 = vrot.slane %v187, %v193
        %v196 = vunpack.c.l.s4 1966171168
        %v197 = vunpack.c.0.s8 %v196
        %v198 = vlaneseq
        %v199 = vshrl.u32 %v198, 7
        %v200 = vsub.s32 %v197, %v199
        %v201 = vrot.slane %v194, %v200
        %v203 = vlaneseq
        %vm204 = vcmp.ge.s32.totalorder %v203, 0
        %vm205 = vcmp.lt.s32.totalorder %v203, 256
        %vm206 = vmand %vm204, %vm205
        %207 = vst.msk [vmem:[%s161] sm:$0x3] %vm206, %v201
        %s208 = sand.u32 %s77, 1
        %s209 = scalar_lea.sflag [#allocation4], %s208
        %s210 = sand.u32 %s77, 1
        %s211 = smul.addr %s210, 2
        %s212 = scalar_lea.vmem [#allocation5], %s211
        // Predicated region
        $region29: #{tpu_custom_call.1} parent=23 // pred_check
          %p213 = pneg %p87
        $region30: #{tpu_custom_call.1} parent=23 // pred_check_branch
          %215 = sbr.rel (%p213) target = $region32
        $region31: #{tpu_custom_call.1} parent=23 // pred_region
          %s216 = smul.u32 2, %s24
          %s218 = ssub.s32 32, 32
          %219 = vsyncadd %s209, %s218
          %s220 = smul.addr %s23, 2
          %s221 = sadd.s32 %s216, %s220
          %s222 = smul.addr %s221, 16
          %s223 = scalar_lea.hbm %s1, %s222
          %s225 = sshll.u32 %s212, 4
          %s226 = int_to_ptr.vmem [resolvable:$true] %s225
          %228 = dma.vmem_to_hbm [thread:$0]  %s226, 32, %s223, %s209
        $region32: #{tpu_custom_call.1} parent=23 // pred_fallthru
          _
      $region24: #{tpu_custom_call.1} parent=5 // pred_fallthru
        _
      %p229 = scmp.le.s32.totalorder 2, %s13
      // Predicated region
      $region33: #{tpu_custom_call.1} parent=5 // pred_check
        %p230 = pneg %p229
      $region34: #{tpu_custom_call.1} parent=5 // pred_check_branch
        %232 = sbr.rel (%p230) target = $region36
      $region35: #{tpu_custom_call.1} parent=5 // pred_region
        %s233 = ssub.s32 %s13, 2
        // Predicated region
        $region37: #{tpu_custom_call.1} parent=35 // pred_check
          %p234 = pneg %p93
        $region38: #{tpu_custom_call.1} parent=35 // pred_check_branch
          %236 = sbr.rel (%p234) target = $region40
        $region39: #{tpu_custom_call.1} parent=35 // pred_region
          %s237 = sand.u32 %s78, 1
          %s238 = scalar_lea.sflag [#allocation4], %s237
          %s239 = sand.u32 %s78, 1
          %s240 = smul.addr %s239, 2
          %s241 = scalar_lea.vmem [#allocation5], %s240
          %242 = dma.done %s238, 32
        $region40: #{tpu_custom_call.1} parent=35 // pred_fallthru
          _
      $region36: #{tpu_custom_call.1} parent=5 // pred_fallthru
        _
    $region6: #{tpu_custom_call.1} parent=1 // loop_footer
      %s17 = sadd.s32 1, %s13
    $region7: #{tpu_custom_call.1} parent=1 // loop_footer_branch
      %12 = sbr.rel target = $region3
    $region8: #{tpu_custom_call.1} parent=1 // loop_exit
      _
    %243 = vsyncpa [#allocation3], 1
    %s244 = scalar_lea.sflag [#allocation3], 1
    %245 = vsyncpa %s244, 1
    %246 = vsyncpa [#allocation4], 1
    %s247 = scalar_lea.sflag [#allocation4], 1
    %248 = vsyncpa %s247, 1

</llo_original>
